<compile_context>
chip_gen: v6e
topology: v6e:2x2x1
jax: 0.10.0
libtpu: 0.0.40
codegen_flags: <defaults>
</compile_context>

<pallas_src>
import functools

import jax
import jax.numpy as jnp
from jax.experimental import pallas as pl
from jax.experimental.pallas import tpu as pltpu

# Make the pure-JAX reference use true f32 matmuls so it is numerically
# comparable to the Pallas MXU kernels.
jax.config.update("jax_default_matmul_precision", "highest")


# -----------------------------------------------------------------------------
# helpers
# -----------------------------------------------------------------------------
def _choose_tile(full: int, cap: int) -> int:
    """Largest tile <= cap that divides `full` (full-extent blocks are always legal)."""
    if full <= cap:
        return full
    for t in (cap, 512, 256, 128, 64, 32, 16, 8):
        if t <= cap and full % t == 0:
            return t
    return full


# -----------------------------------------------------------------------------
# Kernel 1: fused LayerNorm over the last dim
# -----------------------------------------------------------------------------
def _layernorm_kernel(x_ref, g_ref, b_ref, o_ref, *, eps: float):
    x = x_ref[...].astype(jnp.float32)
    mean = jnp.mean(x, axis=-1, keepdims=True)
    xc = x - mean
    var = jnp.mean(xc * xc, axis=-1, keepdims=True)
    inv = jax.lax.rsqrt(var + eps)                     # EUP, not a VPU divide
    y = xc * inv * g_ref[...].astype(jnp.float32) + b_ref[...].astype(jnp.float32)
    o_ref[...] = y.astype(o_ref.dtype)


def layernorm(x, gamma, beta, eps: float = 1e-5):
    M, C = x.shape
    tm = _choose_tile(M, 256)
    g2 = gamma.reshape(1, C)
    b2 = beta.reshape(1, C)
    return pl.pallas_call(
        functools.partial(_layernorm_kernel, eps=eps),
        out_shape=jax.ShapeDtypeStruct((M, C), x.dtype),
        grid=(M // tm,),
        in_specs=[
            pl.BlockSpec((tm, C), lambda i: (i, 0)),
            pl.BlockSpec((1, C), lambda i: (0, 0)),
            pl.BlockSpec((1, C), lambda i: (0, 0)),
        ],
        out_specs=pl.BlockSpec((tm, C), lambda i: (i, 0)),
        compiler_params=pltpu.CompilerParams(dimension_semantics=("parallel",)),
    )(x, g2, b2)


# -----------------------------------------------------------------------------
# Kernel 2: tiled Linear  y = act(x @ w + b) (+ residual), f32 accumulator
# -----------------------------------------------------------------------------
def _linear_kernel(*refs, activation, with_residual):
    if with_residual:
        x_ref, w_ref, b_ref, r_ref, o_ref, acc_ref = refs
    else:
        x_ref, w_ref, b_ref, o_ref, acc_ref = refs
        r_ref = None

    @pl.when(pl.program_id(2) == 0)
    def _init():
        acc_ref[...] = jnp.zeros_like(acc_ref)

    acc_ref[...] += jnp.dot(
        x_ref[...], w_ref[...], preferred_element_type=jnp.float32
    )

    @pl.when(pl.program_id(2) == pl.num_programs(2) - 1)
    def _finalize():
        y = acc_ref[...] + b_ref[...].astype(jnp.float32)
        if activation == "gelu":
            y = jax.nn.gelu(y, approximate=True)  # tanh-approx GELU (EUP tanh)
        if with_residual:
            y = y + r_ref[...].astype(jnp.float32)
        o_ref[...] = y.astype(o_ref.dtype)


def linear(x, w, b, *, residual=None, activation=None):
    M, K = x.shape
    K2, N = w.shape
    assert K == K2, (K, K2)
    tm = _choose_tile(M, 256)
    tn = _choose_tile(N, 512)
    tk = _choose_tile(K, 512)
    assert M % tm == 0 and N % tn == 0 and K % tk == 0

    b2 = b.reshape(1, N)
    in_specs = [
        pl.BlockSpec((tm, tk), lambda i, j, k: (i, k)),
        pl.BlockSpec((tk, tn), lambda i, j, k: (k, j)),
        pl.BlockSpec((1, tn), lambda i, j, k: (0, j)),
    ]
    args = [x, w, b2]
    if residual is not None:
        in_specs.append(pl.BlockSpec((tm, tn), lambda i, j, k: (i, j)))
        args.append(residual)

    kernel = functools.partial(
        _linear_kernel, activation=activation, with_residual=residual is not None
    )
    return pl.pallas_call(
        kernel,
        out_shape=jax.ShapeDtypeStruct((M, N), x.dtype),
        grid_spec=pltpu.PrefetchScalarGridSpec(
            num_scalar_prefetch=0,
            grid=(M // tm, N // tn, K // tk),
            in_specs=in_specs,
            out_specs=pl.BlockSpec((tm, tn), lambda i, j, k: (i, j)),
            scratch_shapes=[pltpu.VMEM((tm, tn), jnp.float32)],
        ),
        compiler_params=pltpu.CompilerParams(
            dimension_semantics=("parallel", "parallel", "arbitrary")
        ),
    )(*args)


# -----------------------------------------------------------------------------
# Kernel 3: softmax attention, one (batch, head) per grid step
# -----------------------------------------------------------------------------
def _attn_kernel(q_ref, k_ref, v_ref, o_ref, *, scale: float):
    q = q_ref[...].astype(jnp.float32)                 # (N, Dh)
    k = k_ref[...].astype(jnp.float32)                 # (N, Dh)
    v = v_ref[...].astype(jnp.float32)                 # (N, Dh)
    s = jnp.dot(q, k.T, preferred_element_type=jnp.float32) * scale   # (N, N)
    m = jnp.max(s, axis=-1, keepdims=True)
    p = jnp.exp(s - m)
    denom = jnp.sum(p, axis=-1, keepdims=True)
    o = jnp.dot(p, v, preferred_element_type=jnp.float32)
    o = o * pl.reciprocal(denom, approx=True)          # EUP reciprocal, no VPU divide
    o_ref[...] = o.astype(o_ref.dtype)


def attention(q, k, v, scale: float):
    BH, N, Dh = q.shape
    spec = pl.BlockSpec((None, N, Dh), lambda i: (i, 0, 0))   # leading dim squeezed
    return pl.pallas_call(
        functools.partial(_attn_kernel, scale=scale),
        out_shape=jax.ShapeDtypeStruct((BH, N, Dh), q.dtype),
        grid=(BH,),
        in_specs=[spec, spec, spec],
        out_specs=spec,
        compiler_params=pltpu.CompilerParams(dimension_semantics=("parallel",)),
    )(q, k, v)


# -----------------------------------------------------------------------------
# Python wrapper mirroring the PyTorch `Block` module
# -----------------------------------------------------------------------------
class PallasBlock:
    def __init__(self, dim, num_heads, mlp_ratio=4.0, qkv_bias=False, qk_scale=None,
                 drop=0.0, attn_drop=0.0, drop_path=0.0, *, key):
        assert dim % num_heads == 0
        self.dim = dim
        self.num_heads = num_heads
        self.head_dim = dim // num_heads
        self.scale = qk_scale if qk_scale is not None else self.head_dim ** -0.5
        hidden = int(dim * mlp_ratio)
        self.hidden = hidden

        ks = list(jax.random.split(key, 16))

        def init_w(k, fan_in, fan_out):
            return jax.random.normal(k, (fan_in, fan_out), jnp.float32) / jnp.sqrt(
                jnp.float32(fan_in)
            )

        p = {}
        # modality-specific LayerNorm params (randomized so branches differ)
        for i, name in enumerate(
            ["norm1", "norm1_a", "norm1_v", "norm2", "norm2_a", "norm2_v"]
        ):
            kg, kb = jax.random.split(ks[i])
            p[name + "_g"] = 1.0 + 0.1 * jax.random.normal(kg, (dim,), jnp.float32)
            p[name + "_b"] = 0.1 * jax.random.normal(kb, (dim,), jnp.float32)
        p["w_qkv"] = init_w(ks[6], dim, 3 * dim)
        p["b_qkv"] = (
            0.1 * jax.random.normal(ks[7], (3 * dim,), jnp.float32)
            if qkv_bias
            else jnp.zeros((3 * dim,), jnp.float32)
        )
        p["w_proj"] = init_w(ks[8], dim, dim)
        p["b_proj"] = 0.1 * jax.random.normal(ks[9], (dim,), jnp.float32)
        p["w_fc1"] = init_w(ks[10], dim, hidden)
        p["b_fc1"] = 0.1 * jax.random.normal(ks[11], (hidden,), jnp.float32)
        p["w_fc2"] = init_w(ks[12], hidden, dim)
        p["b_fc2"] = 0.1 * jax.random.normal(ks[13], (dim,), jnp.float32)
        self.params = p
        # drop / attn_drop / drop_path == 0.0 -> identity (see TODO at top)

    def __call__(self, x, modality=None):
        p = self.params
        sfx = {None: "", "a": "_a", "v": "_v"}[modality]
        B, N, C = x.shape
        H, Dh = self.num_heads, self.head_dim
        x2 = x.reshape(B * N, C)

        # --- attention branch ---
        h = layernorm(x2, p["norm1" + sfx + "_g"], p["norm1" + sfx + "_b"])
        qkv = linear(h, p["w_qkv"], p["b_qkv"])                       # (B*N, 3C)
        qkv = qkv.reshape(B, N, 3, H, Dh).transpose(2, 0, 3, 1, 4)    # (3,B,H,N,Dh)
        q = qkv[0].reshape(B * H, N, Dh)
        k = qkv[1].reshape(B * H, N, Dh)
        v = qkv[2].reshape(B * H, N, Dh)
        ao = attention(q, k, v, self.scale)                           # (B*H,N,Dh)
        ao = ao.reshape(B, H, N, Dh).transpose(0, 2, 1, 3).reshape(B * N, C)
        x2 = linear(ao, p["w_proj"], p["b_proj"], residual=x2)        # + residual

        # --- MLP branch ---
        h2 = layernorm(x2, p["norm2" + sfx + "_g"], p["norm2" + sfx + "_b"])
        m = linear(h2, p["w_fc1"], p["b_fc1"], activation="gelu")
        x2 = linear(m, p["w_fc2"], p["b_fc2"], residual=x2)           # + residual

        return x2.reshape(B, N, C)


# -----------------------------------------------------------------------------
# pure-JAX reference for correctness checking
# -----------------------------------------------------------------------------
def block_reference(x, params, num_heads, scale, modality):
    p = params
    sfx = {None: "", "a": "_a", "v": "_v"}[modality]
    eps = 1e-5

    def ln(t, g, b):
        mu = jnp.mean(t, axis=-1, keepdims=True)
        tc = t - mu
        var = jnp.mean(tc * tc, axis=-1, keepdims=True)
        return tc * jax.lax.rsqrt(var + eps) * g + b

    B, N, C = x.shape
    H = num_heads
    Dh = C // H

    h = ln(x, p["norm1" + sfx + "_g"], p["norm1" + sfx + "_b"])
    qkv = h @ p["w_qkv"] + p["b_qkv"]
    qkv = qkv.reshape(B, N, 3, H, Dh).transpose(2, 0, 3, 1, 4)
    q, k, v = qkv[0], qkv[1], qkv[2]                                  # (B,H,N,Dh)
    attn = jax.nn.softmax((q @ jnp.swapaxes(k, -1, -2)) * scale, axis=-1)
    ao = (attn @ v).transpose(0, 2, 1, 3).reshape(B, N, C)
    x = x + (ao @ p["w_proj"] + p["b_proj"])

    h2 = ln(x, p["norm2" + sfx + "_g"], p["norm2" + sfx + "_b"])
    m = jax.nn.gelu(h2 @ p["w_fc1"] + p["b_fc1"], approximate=True)
    x = x + (m @ p["w_fc2"] + p["b_fc2"])
    return x


# -----------------------------------------------------------------------------
# main
# -----------------------------------------------------------------------------
if __name__ == "__main__":
    key = jax.random.PRNGKey(0)
    k_x, k_params = jax.random.split(key)

    B, N, C, H = 2, 16, 128, 4          # seq=16, hidden dim=128, 4 heads, mlp=512
    x = jax.random.normal(k_x, (B, N, C), dtype=jnp.float32)

    block = PallasBlock(dim=C, num_heads=H, mlp_ratio=4.0, qkv_bias=True,
                        key=k_params)

    for modality in (None, "a", "v"):
        out = block(x, modality=modality)
        out = jax.block_until_ready(out)
        ref = block_reference(x, block.params, block.num_heads, block.scale, modality)
        ref = jax.block_until_ready(ref)
        assert out.shape == (B, N, C)
        assert jnp.allclose(out, ref, atol=1e-2, rtol=1e-2), (
            f"mismatch for modality={modality}: "
            f"max_abs_diff={float(jnp.max(jnp.abs(out - ref)))}"
        )

    print("KERNEL_OK")
</pallas_src>

<mosaic_0001>
module attributes {stable_mosaic.version = 11 : i64} {
  func.func @_layernorm_kernel(%arg0: i32, %arg1: memref<32x128xf32, #tpu.memory_space<vmem>>, %arg2: memref<1x128xf32, #tpu.memory_space<vmem>>, %arg3: memref<1x128xf32, #tpu.memory_space<vmem>>, %arg4: memref<32x128xf32, #tpu.memory_space<vmem>>) attributes {dimension_semantics = [#tpu.dimension_semantics<parallel>], iteration_bounds = array<i64: 1>, scalar_prefetch = 0 : i64, scratch_operands = 0 : i64, tpu.core_type = #tpu.core_type<tc>, window_params = [{transform_indices = @transform_0, window_bounds = array<i64: 32, 128>}, {pipeline_mode = #tpu.pipeline_mode<synchronous>, transform_indices = @transform_1, window_bounds = array<i64: 1, 128>}, {pipeline_mode = #tpu.pipeline_mode<synchronous>, transform_indices = @transform_2, window_bounds = array<i64: 1, 128>}, {transform_indices = @transform_3, window_bounds = array<i64: 32, 128>}]} {
    %c0 = arith.constant 0 : index
    %c0_0 = arith.constant 0 : index
    %0 = vector.load %arg1[%c0, %c0_0] : memref<32x128xf32, #tpu.memory_space<vmem>>, vector<32x128xf32>
    %cst = arith.constant dense<0.000000e+00> : vector<32xf32>
    %1 = vector.multi_reduction <add>, %0, %cst [1] : vector<32x128xf32> to vector<32xf32>
    %2 = vector.shape_cast %1 : vector<32xf32> to vector<32x1xf32>
    %cst_1 = arith.constant 1.280000e+02 : f32
    %3 = vector.broadcast %cst_1 : f32 to vector<32x1xf32>
    %4 = arith.divf %2, %3 : vector<32x1xf32>
    %5 = vector.broadcast %4 : vector<32x1xf32> to vector<32x128xf32>
    %6 = arith.subf %0, %5 : vector<32x128xf32>
    %7 = arith.mulf %6, %6 : vector<32x128xf32>
    %cst_2 = arith.constant dense<0.000000e+00> : vector<32xf32>
    %8 = vector.multi_reduction <add>, %7, %cst_2 [1] : vector<32x128xf32> to vector<32xf32>
    %9 = vector.shape_cast %8 : vector<32xf32> to vector<32x1xf32>
    %cst_3 = arith.constant 1.280000e+02 : f32
    %10 = vector.broadcast %cst_3 : f32 to vector<32x1xf32>
    %11 = arith.divf %9, %10 : vector<32x1xf32>
    %cst_4 = arith.constant 9.99999974E-6 : f32
    %12 = vector.broadcast %cst_4 : f32 to vector<32x1xf32>
    %13 = arith.addf %11, %12 : vector<32x1xf32>
    %14 = math.rsqrt %13 : vector<32x1xf32>
    %15 = vector.broadcast %14 : vector<32x1xf32> to vector<32x128xf32>
    %16 = arith.mulf %6, %15 : vector<32x128xf32>
    %c0_5 = arith.constant 0 : index
    %c0_6 = arith.constant 0 : index
    %17 = vector.load %arg2[%c0_5, %c0_6] : memref<1x128xf32, #tpu.memory_space<vmem>>, vector<1x128xf32>
    %18 = vector.broadcast %17 : vector<1x128xf32> to vector<32x128xf32>
    %19 = arith.mulf %16, %18 : vector<32x128xf32>
    %c0_7 = arith.constant 0 : index
    %c0_8 = arith.constant 0 : index
    %20 = vector.load %arg3[%c0_7, %c0_8] : memref<1x128xf32, #tpu.memory_space<vmem>>, vector<1x128xf32>
    %21 = vector.broadcast %20 : vector<1x128xf32> to vector<32x128xf32>
    %22 = arith.addf %19, %21 : vector<32x128xf32>
    %c0_9 = arith.constant 0 : index
    %c0_10 = arith.constant 0 : index
    %23 = vector.load %arg4[%c0_9, %c0_10] : memref<32x128xf32, #tpu.memory_space<vmem>>, vector<32x128xf32>
    tpu.vector_store %arg4[%c0_9, %c0_10], %22 {strides = array<i32>} : memref<32x128xf32, #tpu.memory_space<vmem>>, vector<32x128xf32>,
    return
  }
  func.func @transform_0(%arg0: i32) -> (i32, i32) {
    %c0_i32 = arith.constant 0 : i32
    %c0_i32_0 = arith.constant 0 : i32
    return %arg0, %c0_i32 : i32, i32
  }
  func.func @transform_1(%arg0: i32) -> (i32, i32) {
    %c0_i32 = arith.constant 0 : i32
    %c0_i32_0 = arith.constant 0 : i32
    %c0_i32_1 = arith.constant 0 : i32
    return %c0_i32, %c0_i32_0 : i32, i32
  }
  func.func @transform_2(%arg0: i32) -> (i32, i32) {
    %c0_i32 = arith.constant 0 : i32
    %c0_i32_0 = arith.constant 0 : i32
    %c0_i32_1 = arith.constant 0 : i32
    return %c0_i32, %c0_i32_0 : i32, i32
  }
  func.func @transform_3(%arg0: i32) -> (i32, i32) {
    %c0_i32 = arith.constant 0 : i32
    %c0_i32_0 = arith.constant 0 : i32
    return %arg0, %c0_i32 : i32, i32
  }
}

</mosaic_0001>

<llo_original>
// kernel: tpu_custom_call.1
$region0: #{tpu_custom_call.1}
  #allocation0 [shape = 'u32[]', space=smem, size = 0x4, offset = 0x4, fixed_abs, tag = 'smem constant byte address 0x4 - core index']
  #allocation1 [shape = 'u32[144,128]{1,0:T(1,128)}', space=vmem, size = 0x12000, scoped, tag = 'internal scratch']
  %s0 = inlined_call_operand.hbm [shape: f32[32,128], index: 0, kind: input, shape index: {}]
  %s1 = inlined_call_operand.vmem [shape: f32[1,128], index: 1, kind: input, shape index: {}]
  %s2 = inlined_call_operand.vmem [shape: f32[1,128], index: 2, kind: input, shape index: {}]
  %s3 = inlined_call_operand.hbm [shape: f32[32,128], index: 3, kind: output, shape index: {}]
  %s4 = sld [smem:[#allocation0]]
  $region26: #{tpu_custom_call.1} parent=0
    _
  %s6 = ssub.s32 1, %s4
  %s7 = scalar_select 0, %s6, %s4
  $region1: #{tpu_custom_call.1} parent=0
    #allocation2 [shape = 'u8[16384]{0}', space=vmem, size = 0x4000, scoped, tag = 'input window, operand 0, single buffered']
    #allocation3 [shape = 's32[1]{0}', space=sflag, size = 0x4, scoped, tag = 'scoped memory for tpu_custom_call.1']
    #allocation4 [shape = 's32[1]{0}', space=sflag, size = 0x4, scoped, tag = 'scoped memory for tpu_custom_call.1']
    #allocation5 [shape = 'u8[16384]{0}', space=vmem, size = 0x4000, scoped, tag = 'output window, operand 0, single buffered']
    %8 = vsyncpa [#allocation3], 0
    %9 = vsyncpa [#allocation4], 0
    // Predicated region
    $region2: #{tpu_custom_call.1} parent=1 // pred_check
      _
    $region3: #{tpu_custom_call.1} parent=1 // pred_check_branch
      %11 = sbr.rel (0) target = $region5
    $region4: #{tpu_custom_call.1} parent=1 // pred_region
      %s13 = ssub.s32 512, 512
      %14 = vsyncadd [#allocation3], %s13
      %s15 = sshll.u32 [#allocation2], 4
      %s16 = int_to_ptr.vmem [resolvable:$true] %s15
      %21 = dma.hbm_to_vmem [thread:$0]  %s0, 512, %s16, [#allocation3], 128, 128, 8
    $region5: #{tpu_custom_call.1} parent=1 // pred_fallthru
      _
    // Predicated region
    $region6: #{tpu_custom_call.1} parent=1 // pred_check
      _
    $region7: #{tpu_custom_call.1} parent=1 // pred_check_branch
      %23 = sbr.rel (0) target = $region9
    $region8: #{tpu_custom_call.1} parent=1 // pred_region
      _
    $region9: #{tpu_custom_call.1} parent=1 // pred_fallthru
      _
    // Predicated region
    $region10: #{tpu_custom_call.1} parent=1 // pred_check
      _
    $region11: #{tpu_custom_call.1} parent=1 // pred_check_branch
      %25 = sbr.rel (0) target = $region13
    $region12: #{tpu_custom_call.1} parent=1 // pred_region
      _
    $region13: #{tpu_custom_call.1} parent=1 // pred_fallthru
      _
    // Predicated region
    $region14: #{tpu_custom_call.1} parent=1 // pred_check
      _
    $region15: #{tpu_custom_call.1} parent=1 // pred_check_branch
      %27 = sbr.rel (0) target = $region17
    $region16: #{tpu_custom_call.1} parent=1 // pred_region
      %28 = dma.done [#allocation3], 512
    $region17: #{tpu_custom_call.1} parent=1 // pred_fallthru
      _
    %v29 = vld [vmem:[#allocation2] sm:$0xff]
    %v30 = vld [vmem:[#allocation2 + $0x8] sm:$0xff]
    %v31 = vld [vmem:[#allocation2 + $0x10] sm:$0xff]
    %v32 = vld [vmem:[#allocation2 + $0x18] sm:$0xff]
    %33 = vadd.xlane.f32.xlu0 %v29
    %v34 = vpop.xlane.xlu0 %33
    %35 = vadd.xlane.f32.xlu0 %v30
    %v36 = vpop.xlane.xlu0 %35
    %37 = vadd.xlane.f32.xlu0 %v31
    %v38 = vpop.xlane.xlu0 %37
    %39 = vadd.xlane.f32.xlu0 %v32
    %v40 = vpop.xlane.xlu0 %39
    %v41 = vrcp.pop 128.0
    %v42 = vmul.f32 %v34, %v41
    %v43 = vmul.f32 %v36, %v41
    %v44 = vmul.f32 %v38, %v41
    %v45 = vmul.f32 %v40, %v41
    %v46 = vsub.f32 %v29, %v42
    %v47 = vsub.f32 %v30, %v43
    %v48 = vsub.f32 %v31, %v44
    %v49 = vsub.f32 %v32, %v45
    %v50 = vmul.f32 %v46, %v46
    %v51 = vmul.f32 %v47, %v47
    %v52 = vmul.f32 %v48, %v48
    %v53 = vmul.f32 %v49, %v49
    %54 = vadd.xlane.f32.xlu0 %v50
    %v55 = vpop.xlane.xlu0 %54
    %56 = vadd.xlane.f32.xlu0 %v51
    %v57 = vpop.xlane.xlu0 %56
    %58 = vadd.xlane.f32.xlu0 %v52
    %v59 = vpop.xlane.xlu0 %58
    %60 = vadd.xlane.f32.xlu0 %v53
    %v61 = vpop.xlane.xlu0 %60
    %v62 = vmul.f32 %v55, %v41
    %v63 = vmul.f32 %v57, %v41
    %v64 = vmul.f32 %v59, %v41
    %v65 = vmul.f32 %v61, %v41
    %v66 = vadd.f32 %v62, 1e-05
    %v67 = vadd.f32 %v63, 1e-05
    %v68 = vadd.f32 %v64, 1e-05
    %v69 = vadd.f32 %v65, 1e-05
    %v70 = vrsqrt.pop %v66
    %v71 = vrsqrt.pop %v67
    %v72 = vrsqrt.pop %v68
    %v73 = vrsqrt.pop %v69
    %v74 = vmul.f32 %v46, %v70
    %v75 = vmul.f32 %v47, %v71
    %v76 = vmul.f32 %v48, %v72
    %v77 = vmul.f32 %v49, %v73
    %v78 = vld [vmem:[%s1] sm:$0x1]
    %v80 = vlaneseq
    %v81 = vshrl.u32 %v80, 7
    %v82 = vsub.s32 0, %v81
    %v83 = vrot.slane %v78, %v82
    %v85 = vmul.f32 %v74, %v83
    %v86 = vmul.f32 %v75, %v83
    %v87 = vmul.f32 %v76, %v83
    %v88 = vmul.f32 %v77, %v83
    %v89 = vld [vmem:[%s2] sm:$0x1]
    %v91 = vlaneseq
    %v92 = vshrl.u32 %v91, 7
    %v93 = vsub.s32 0, %v92
    %v94 = vrot.slane %v89, %v93
    %v96 = vadd.f32 %v85, %v94
    %v97 = vadd.f32 %v86, %v94
    %v98 = vadd.f32 %v87, %v94
    %v99 = vadd.f32 %v88, %v94
    %100 = vst [vmem:[#allocation5] sm:$0xff] %v96
    %101 = vst [vmem:[#allocation5 + $0x8] sm:$0xff] %v97
    %102 = vst [vmem:[#allocation5 + $0x10] sm:$0xff] %v98
    %103 = vst [vmem:[#allocation5 + $0x18] sm:$0xff] %v99
    // Predicated region
    $region18: #{tpu_custom_call.1} parent=1 // pred_check
      _
    $region19: #{tpu_custom_call.1} parent=1 // pred_check_branch
      %105 = sbr.rel (0) target = $region21
    $region20: #{tpu_custom_call.1} parent=1 // pred_region
      %s107 = ssub.s32 512, 512
      %108 = vsyncadd [#allocation4], %s107
      %s109 = sshll.u32 [#allocation5], 4
      %s110 = int_to_ptr.vmem [resolvable:$true] %s109
      %115 = dma.vmem_to_hbm [thread:$0]  %s110, 512, %s3, [#allocation4], 128, 128, 8
    $region21: #{tpu_custom_call.1} parent=1 // pred_fallthru
      _
    // Predicated region
    $region22: #{tpu_custom_call.1} parent=1 // pred_check
      _
    $region23: #{tpu_custom_call.1} parent=1 // pred_check_branch
      %117 = sbr.rel (0) target = $region25
    $region24: #{tpu_custom_call.1} parent=1 // pred_region
      %118 = dma.done [#allocation4], 512
    $region25: #{tpu_custom_call.1} parent=1 // pred_fallthru
      _
    %119 = vsyncpa [#allocation3], 1
    %120 = vsyncpa [#allocation4], 1

</llo_original>
